<compile_context>
chip_gen: v7x
topology: tpu7x:2x2x1
jax: 0.10.0
libtpu: 0.0.40
codegen_flags: <defaults>
</compile_context>

<pallas_src>
import functools
import math

import jax
import jax.numpy as jnp
from jax.experimental import pallas as pl
from jax.experimental.pallas import tpu as pltpu

_LANES = 128  # TPU vreg lane width


def make_positional_encoding(d_model: int, max_len: int = 30) -> jnp.ndarray:
    """Host-side pe buffer, built exactly as the PyTorch __init__ does."""
    position = jnp.arange(0, max_len, dtype=jnp.float32)                       # [max_len]
    div_term = jnp.exp(
        jnp.arange(0, d_model, 2, dtype=jnp.float32) * (-math.log(10000.0) / d_model)
    )                                                                           # [ceil(D/2)]
    angles = position[:, None] * div_term[None, :]                              # [max_len, ceil(D/2)]
    pe = jnp.zeros((max_len, d_model), dtype=jnp.float32)
    pe = pe.at[:, 0::2].set(jnp.sin(angles))
    pe = pe.at[:, 1::2].set(jnp.cos(angles[:, : d_model // 2]))
    return pe[None, :, :]                                                       # [1, max_len, D]


def _add_pe_kernel(x_ref, pe_ref, o_ref):
    """x_ref: (bb, A, L) block of x.  pe_ref: (A, L) VMEM-resident pe slab.

    Pure broadcast add; accumulate in f32 and cast back to the output dtype.
    """
    o_ref[...] = (x_ref[...].astype(jnp.float32) + pe_ref[...][None, :, :]).astype(o_ref.dtype)


def positional_encoding_forward(x: jnp.ndarray, pe: jnp.ndarray,
                                *, block_bytes: int = 4 * 1024 * 1024,
                                use_pallas: bool | None = None) -> jnp.ndarray:
    """x: [B, S, D].  pe: [1, max_len, D] (or [max_len, D]), f32.  Returns x + pe[:, :S, :]."""
    B, S, D = x.shape
    max_len, d_model = pe.shape[-2], pe.shape[-1]
    if S > max_len:
        raise ValueError(f"seq_len {S} exceeds max_len {max_len}")
    if D != d_model:
        raise ValueError(f"d_model mismatch: x has {D}, pe has {d_model}")

    pe_sd = pe.reshape(max_len, d_model)[:S].astype(jnp.float32)   # (S, D)

    total = B * S * D
    if use_pallas is None:
        # Tiny tensors: a standalone kernel's launch + per-step overhead dwarfs the
        # sub-us of work; let XLA fuse a plain add instead.
        use_pallas = total >= (1 << 20)
    if not use_pallas:
        return (x.astype(jnp.float32) + pe_sd[None]).astype(x.dtype)

    # ---- layout -------------------------------------------------------------
    if (S * D) % _LANES == 0:
        # Lane-dense slab: free (contiguous) reshape, every store uses all 128 lanes.
        rows = (S * D) // _LANES
        x3 = x.reshape(B, rows, _LANES)
        pe_blk = pe_sd.reshape(rows, _LANES)
    else:
        # Fallback: natural layout.  Last two block dims equal the full array dims,
        # so the (8,128) BlockSpec rule is satisfied; stores are lane-masked for D<128.
        x3 = x
        pe_blk = pe_sd

    # ---- batch blocking -----------------------------------------------------
    inner_elems = x3.shape[1] * x3.shape[2]
    bb_target = max(1, block_bytes // max(1, inner_elems * x.dtype.itemsize))
    bb = 1
    for d in range(1, B + 1):               # largest divisor of B <= bb_target (no ragged tail)
        if B % d == 0 and d <= bb_target:
            bb = d

    x_block = (bb, x3.shape[1], x3.shape[2])

    out3 = pl.pallas_call(
        _add_pe_kernel,
        out_shape=jax.ShapeDtypeStruct(x3.shape, x.dtype),
        grid_spec=pltpu.PrefetchScalarGridSpec(
            num_scalar_prefetch=0,
            grid=(B // bb,),
            in_specs=[
                pl.BlockSpec(x_block, lambda i: (i, 0, 0)),
                # constant index_map: pe slab (a few KiB) stays resident in VMEM
                pl.BlockSpec(pe_blk.shape, lambda i: (0, 0)),
            ],
            out_specs=pl.BlockSpec(x_block, lambda i: (i, 0, 0)),
        ),
        compiler_params=pltpu.CompilerParams(
            dimension_semantics=("parallel",),
            # double-buffered in+out at <=4 MiB blocks stays well under this;
            # safe on v5e/v6e (128 MiB phys) and v7x (64 MiB phys).
            vmem_limit_bytes=32 * 1024 * 1024,
        ),
        input_output_aliases={0: 0},        # in-place x += pe (reshape above is a bitcast)
    )(x3, pe_blk)

    return out3.reshape(B, S, D)


if __name__ == "__main__":
    d_model = 32
    max_len = 30
    batch = 2
    seq_len = 8

    key = jax.random.PRNGKey(0)
    x = jax.random.normal(key, (batch, seq_len, d_model), dtype=jnp.float32)

    pe = make_positional_encoding(d_model, max_len)                 # [1, max_len, D]

    # Force the Pallas path (auto-dispatch would take the plain fused add at this size).
    fwd = jax.jit(functools.partial(positional_encoding_forward, use_pallas=True))
    out = jax.block_until_ready(fwd(x, pe))

    ref = x + pe[:, :seq_len, :]
    assert out.shape == (batch, seq_len, d_model)
    assert out.dtype == x.dtype
    assert jnp.allclose(out, ref, atol=1e-5, rtol=1e-5), "mismatch vs reference"

    print("KERNEL_OK")
</pallas_src>

<mosaic_0001>
module attributes {stable_mosaic.version = 11 : i64} {
  func.func @_add_pe_kernel(%arg0: i32, %arg1: memref<2x2x128xf32, #tpu.memory_space<vmem>>, %arg2: memref<2x128xf32, #tpu.memory_space<vmem>>, %arg3: memref<2x2x128xf32, #tpu.memory_space<vmem>>) attributes {dimension_semantics = [#tpu.dimension_semantics<parallel>], iteration_bounds = array<i64: 1>, scalar_prefetch = 0 : i64, scratch_operands = 0 : i64, tpu.core_type = #tpu.core_type<tc>, window_params = [{transform_indices = @transform_0, window_bounds = array<i64: 2, 2, 128>}, {pipeline_mode = #tpu.pipeline_mode<synchronous>, transform_indices = @transform_1, window_bounds = array<i64: 2, 128>}, {transform_indices = @transform_2, window_bounds = array<i64: 2, 2, 128>}]} {
    %c0 = arith.constant 0 : index
    %c0_0 = arith.constant 0 : index
    %c0_1 = arith.constant 0 : index
    %0 = vector.load %arg1[%c0, %c0_0, %c0_1] : memref<2x2x128xf32, #tpu.memory_space<vmem>>, vector<2x2x128xf32>
    %c0_2 = arith.constant 0 : index
    %c0_3 = arith.constant 0 : index
    %1 = vector.load %arg2[%c0_2, %c0_3] : memref<2x128xf32, #tpu.memory_space<vmem>>, vector<2x128xf32>
    %2 = vector.shape_cast %1 : vector<2x128xf32> to vector<1x2x128xf32>
    %3 = vector.broadcast %2 : vector<1x2x128xf32> to vector<2x2x128xf32>
    %4 = arith.addf %0, %3 : vector<2x2x128xf32>
    %c0_4 = arith.constant 0 : index
    %c0_5 = arith.constant 0 : index
    %c0_6 = arith.constant 0 : index
    %5 = vector.load %arg3[%c0_4, %c0_5, %c0_6] : memref<2x2x128xf32, #tpu.memory_space<vmem>>, vector<2x2x128xf32>
    tpu.vector_store %arg3[%c0_4, %c0_5, %c0_6], %4 {strides = array<i32>} : memref<2x2x128xf32, #tpu.memory_space<vmem>>, vector<2x2x128xf32>,
    return
  }
  func.func @transform_0(%arg0: i32) -> (i32, i32, i32) {
    %c0_i32 = arith.constant 0 : i32
    %c0_i32_0 = arith.constant 0 : i32
    %c0_i32_1 = arith.constant 0 : i32
    return %arg0, %c0_i32, %c0_i32_0 : i32, i32, i32
  }
  func.func @transform_1(%arg0: i32) -> (i32, i32) {
    %c0_i32 = arith.constant 0 : i32
    %c0_i32_0 = arith.constant 0 : i32
    %c0_i32_1 = arith.constant 0 : i32
    return %c0_i32, %c0_i32_0 : i32, i32
  }
  func.func @transform_2(%arg0: i32) -> (i32, i32, i32) {
    %c0_i32 = arith.constant 0 : i32
    %c0_i32_0 = arith.constant 0 : i32
    %c0_i32_1 = arith.constant 0 : i32
    return %arg0, %c0_i32, %c0_i32_0 : i32, i32, i32
  }
}

</mosaic_0001>

<llo_original>
// kernel: positional_encoding_forward.1
$region0: #{positional_encoding_forward.1}
  #allocation0 [shape = 'u32[]', space=smem, size = 0x4, offset = 0x4, fixed_abs, tag = 'smem constant byte address 0x4 - core index']
  #allocation1 [shape = 'u32[144,128]{1,0:T(1,128)}', space=vmem, size = 0x12000, scoped, tag = 'internal scratch']
  %s0 = inlined_call_operand.vmem [shape: f32[2,2,128], index: 0, kind: input, shape index: {}, may-alias: {0,2}]
  %s1 = inlined_call_operand.vmem [shape: f32[2,128], index: 1, kind: input, shape index: {}]
  %s2 = inlined_call_operand.vmem [shape: f32[2,2,128], index: 2, kind: output, shape index: {}, may-alias: {0,2}]
  %s3 = sld [smem:[#allocation0]]
  $region18: #{positional_encoding_forward.1} parent=0
    _
  %s5 = ssub.s32 1, %s3
  %s6 = scalar_select 0, %s5, %s3
  // Predicated region
  $region2: #{positional_encoding_forward.1} parent=0 // pred_check
    _
  $region3: #{positional_encoding_forward.1} parent=0 // pred_check_branch
    %8 = sbr.rel (0) target = $region5
  $region4: #{positional_encoding_forward.1} parent=0 // pred_region
    _
  $region5: #{positional_encoding_forward.1} parent=0 // pred_fallthru
    _
  // Predicated region
  $region6: #{positional_encoding_forward.1} parent=0 // pred_check
    _
  $region7: #{positional_encoding_forward.1} parent=0 // pred_check_branch
    %10 = sbr.rel (0) target = $region9
  $region8: #{positional_encoding_forward.1} parent=0 // pred_region
    _
  $region9: #{positional_encoding_forward.1} parent=0 // pred_fallthru
    _
  %v11 = vld [vmem:[%s0] sm:$0x3]
  %v12 = vld [vmem:[%s0 + $0x2] sm:$0x3]
  %v13 = vld [vmem:[%s1] sm:$0x3]
  %v14 = vadd.f32 %v11, %v13
  %v15 = vadd.f32 %v12, %v13
  %16 = vst [vmem:[%s2] sm:$0x3] %v14
  %17 = vst [vmem:[%s2 + $0x2] sm:$0x3] %v15
  // Predicated region
  $region10: #{positional_encoding_forward.1} parent=0 // pred_check
    _
  $region11: #{positional_encoding_forward.1} parent=0 // pred_check_branch
    %19 = sbr.rel (0) target = $region13
  $region12: #{positional_encoding_forward.1} parent=0 // pred_region
    _
  $region13: #{positional_encoding_forward.1} parent=0 // pred_fallthru
    _
  // Predicated region
  $region14: #{positional_encoding_forward.1} parent=0 // pred_check
    _
  $region15: #{positional_encoding_forward.1} parent=0 // pred_check_branch
    %21 = sbr.rel (0) target = $region17
  $region16: #{positional_encoding_forward.1} parent=0 // pred_region
    _
  $region17: #{positional_encoding_forward.1} parent=0 // pred_fallthru
    _

</llo_original>
